<compile_context>
chip_gen: v7x
topology: tpu7x:2x2x1
jax: 0.10.0
libtpu: 0.0.40
codegen_flags: <defaults>
</compile_context>

<pallas_src>
import functools
import math
from typing import NamedTuple, Optional

import jax
import jax.numpy as jnp
from jax.experimental import pallas as pl
from jax.experimental.pallas import tpu as pltpu


def _round_up(x, m):
    return ((x + m - 1) // m) * m


def _pick_tile(dim, cap):
    """Largest multiple of 128 <= cap that exactly divides `dim` (dim % 128 == 0)."""
    t = max(128, (min(cap, dim) // 128) * 128)
    while dim % t != 0:
        t -= 128
    return t


def _vmem_limit_bytes():
    """Generation-aware scoped-VMEM budget (v7x: 64 MiB physical, v5e/v6e: 128 MiB)."""
    cap = None
    try:
        cap = getattr(pltpu.get_tpu_info(), "vmem_capacity_bytes", None)
    except Exception:
        cap = None
    if cap is None:
        return 48 * 1024 * 1024
    if cap >= 128 * 1024 * 1024:
        return 80 * 1024 * 1024       # v5e / v6e: plenty of physical VMEM
    return 44 * 1024 * 1024           # v7x: leave headroom inside 64 MiB


class FCParams(NamedTuple):
    weight: jax.Array             # (Kp, Np) compute dtype, zero-padded to 128-multiples
    bias: Optional[jax.Array]     # (1, Np) float32, or None
    input_size: int               # original K
    output_size: int              # original N


def init_fc_params(key, input_size, hidden_size, bias=True):
    """Matches FCLayer.init_hidden(): weight ~ U(-r, r), r = 1/sqrt(in*hid); bias = 0."""
    initrange = 1.0 / math.sqrt(input_size * hidden_size)
    # torch weight shape is (hidden, input); keep it transposed for the kernel.
    w = jax.random.uniform(
        key, (hidden_size, input_size), dtype=jnp.float32,
        minval=-initrange, maxval=initrange,
    )
    w_t = jnp.transpose(w)                                   # (input_size, hidden_size)
    b = jnp.zeros((hidden_size,), jnp.float32) if bias else None
    return w_t, b


def prepare_fc_params(weight_t, bias=None, compute_dtype=jnp.bfloat16):
    """One-time prep: pad weight/bias to lane multiples and cast to the MXU dtype."""
    # TODO(synk): optional int8 quantized-weight path for v5e/v6e (MXU int path),
    # with dequant scale applied in the epilogue; not portable to v7x.
    K, N = weight_t.shape
    Kp, Np = _round_up(K, 128), _round_up(N, 128)
    w = weight_t
    if (Kp, Np) != (K, N):
        w = jnp.pad(w, ((0, Kp - K), (0, Np - N)))
    w = w.astype(compute_dtype)
    b = None
    if bias is not None:
        b = jnp.pad(bias.astype(jnp.float32), (0, Np - N)).reshape(1, Np)
    return FCParams(weight=w, bias=b, input_size=K, output_size=N)


def _fc_kernel(*refs, nonlinearity, has_bias, use_acc_scratch):
    # Ref order: inputs (x, w[, b]), output o, [scratch acc].
    if use_acc_scratch:
        *io_refs, acc_ref = refs
    else:
        io_refs, acc_ref = refs, None
    if has_bias:
        x_ref, w_ref, b_ref, o_ref = io_refs
    else:
        x_ref, w_ref, o_ref = io_refs
        b_ref = None
    # f32 outputs accumulate directly in the resident output block (index_map
    # ignores k) -> no scratch, no final copy.
    acc = o_ref if acc_ref is None else acc_ref

    k = pl.program_id(2)

    @pl.when(k == 0)
    def _():
        if has_bias:
            acc[...] = jnp.broadcast_to(b_ref[...], acc.shape).astype(acc.dtype)
        else:
            acc[...] = jnp.zeros_like(acc)

    acc[...] += jnp.dot(x_ref[...], w_ref[...], preferred_element_type=jnp.float32)

    if use_acc_scratch or nonlinearity is not None:
        @pl.when(k == pl.num_programs(2) - 1)
        def _():
            r = acc[...]
            if nonlinearity == "relu":
                r = jnp.maximum(r, 0.0)
            elif nonlinearity == "tanh":
                r = jnp.tanh(r)
            elif nonlinearity == "sigmoid":
                r = jax.nn.sigmoid(r)
            o_ref[...] = r.astype(o_ref.dtype)


def fc_layer(x, params, nonlinearity=None):
    """y = x @ W_t (+ b), optional elementwise nonlinearity.

    x:      (batch, input_size), float
    params: FCParams from prepare_fc_params()
    nonlinearity: None | "relu" | "tanh" | "sigmoid"
    """
    if nonlinearity not in (None, "relu", "tanh", "sigmoid"):
        # TODO(synk): other torch.nn.functional nonlinearities are not mapped.
        raise ValueError(f"unsupported nonlinearity: {nonlinearity}")

    w, b = params.weight, params.bias
    K, N = params.input_size, params.output_size
    Kp, Np = w.shape
    B, Kx = x.shape
    if Kx != K:
        raise ValueError(f"input feature dim {Kx} != expected {K}")

    out_dtype = x.dtype
    has_bias = b is not None
    use_acc_scratch = jnp.dtype(out_dtype) != jnp.dtype(jnp.float32)

    # Cast activations to the MXU dtype; pad K only when it is not lane-aligned
    # (the K reduction must stay zero-padded for correctness).
    x_c = x if x.dtype == w.dtype else x.astype(w.dtype)
    if Kp != K:
        x_c = jnp.pad(x_c, ((0, 0), (0, Kp - K)))

    # --- tile selection: lane-dense, ~10 MiB double-buffered footprint -------
    tm = min(512, _round_up(B, 8))
    tn = _pick_tile(Np, 512)
    tk = _pick_tile(Kp, 2048)
    grid = (pl.cdiv(B, tm), Np // tn, Kp // tk)

    in_specs = [
        pl.BlockSpec((tm, tk), lambda i, j, k: (i, k)),
        # TODO(synk): sweep pipeline_mode=pl.Buffered(3) on the weight spec for
        # small-batch (weight-streaming-bound) shapes; revert if VMEM-bound on v7x.
        pl.BlockSpec((tk, tn), lambda i, j, k: (k, j)),
    ]
    inputs = [x_c, w]
    if has_bias:
        in_specs.append(pl.BlockSpec((1, tn), lambda i, j, k: (0, j)))
        inputs.append(b)

    scratch_shapes = [pltpu.VMEM((tm, tn), jnp.float32)] if use_acc_scratch else []

    kernel = functools.partial(
        _fc_kernel, nonlinearity=nonlinearity,
        has_bias=has_bias, use_acc_scratch=use_acc_scratch,
    )

    bytes_accessed = (
        B * Kp * x_c.dtype.itemsize
        + Kp * Np * w.dtype.itemsize
        + (Np * 4 if has_bias else 0)
        + B * Np * jnp.dtype(out_dtype).itemsize
    )
    cost = pl.CostEstimate(
        flops=2 * B * Np * Kp,
        transcendentals=(B * Np if nonlinearity in ("tanh", "sigmoid") else 0),
        bytes_accessed=bytes_accessed,
    )

    out = pl.pallas_call(
        kernel,
        out_shape=jax.ShapeDtypeStruct((B, Np), out_dtype),
        grid_spec=pltpu.PrefetchScalarGridSpec(
            num_scalar_prefetch=0,
            grid=grid,
            in_specs=in_specs,
            out_specs=pl.BlockSpec((tm, tn), lambda i, j, k: (i, j)),
            scratch_shapes=scratch_shapes,
        ),
        # TODO(synk): on v7x (2 TCs/chip) verify the M/N axes actually shard
        # across cores; if not, mark the larger one pltpu.CORE_PARALLEL.
        compiler_params=pltpu.CompilerParams(
            dimension_semantics=("parallel", "parallel", "arbitrary"),
            vmem_limit_bytes=_vmem_limit_bytes(),
        ),
        cost_estimate=cost,
    )(*inputs)

    return out if Np == N else out[:, :N]


if __name__ == "__main__":
    key = jax.random.PRNGKey(0)
    k1, k2, k3, k4 = jax.random.split(key, 4)

    def rel_err(a, ref):
        scale = jnp.maximum(jnp.max(jnp.abs(ref)), 1e-6)
        return float(jnp.max(jnp.abs(a.astype(jnp.float32) - ref)) / scale)

    TOL = 2e-2  # bf16 MXU inputs with f32 accumulation

    # ---- small demo shapes matching the module: (batch, input_size) ----
    batch, input_size, hidden_size = 8, 32, 64
    x = jax.random.normal(k1, (batch, input_size), dtype=jnp.float32)
    w_t, b = init_fc_params(k2, input_size, hidden_size, bias=True)
    params = prepare_fc_params(w_t, b)

    ref = x @ w_t + b
    y = jax.block_until_ready(fc_layer(x, params))
    assert y.shape == (batch, hidden_size)
    assert rel_err(y, ref) < TOL, "linear mismatch"

    y_relu = jax.block_until_ready(fc_layer(x, params, "relu"))
    assert rel_err(y_relu, jnp.maximum(ref, 0.0)) < TOL, "relu mismatch"
    y_tanh = jax.block_until_ready(fc_layer(x, params, "tanh"))
    assert rel_err(y_tanh, jnp.tanh(ref)) < TOL, "tanh mismatch"
    y_sig = jax.block_until_ready(fc_layer(x, params, "sigmoid"))
    assert rel_err(y_sig, jax.nn.sigmoid(ref)) < TOL, "sigmoid mismatch"

    # ---- bias=False path (faithful to the PyTorch contract) ----
    w_t_nb, b_nb = init_fc_params(k3, input_size, hidden_size, bias=False)
    assert b_nb is None
    p_nb = prepare_fc_params(w_t_nb, None)
    y_nb = jax.block_until_ready(fc_layer(x, p_nb))
    assert rel_err(y_nb, x @ w_t_nb) < TOL, "no-bias mismatch"

    # ---- multi-step K reduction exercising accumulate + epilogue ----
    B2, K2, N2 = 256, 4096, 512
    x2 = jax.random.normal(k4, (B2, K2), dtype=jnp.float32)
    w2_t, b2 = init_fc_params(k2, K2, N2, bias=True)
    p2 = prepare_fc_params(w2_t, b2)
    y2 = jax.block_until_ready(fc_layer(x2, p2, "relu"))
    ref2 = jnp.maximum(x2 @ w2_t + b2, 0.0)
    assert rel_err(y2, ref2) < TOL, "tiled relu mismatch"

    # ---- unaligned shapes: K padded, N padded+sliced, partial batch block ----
    B3, K3, N3 = 100, 300, 200
    x3 = jax.random.normal(k3, (B3, K3), dtype=jnp.float32)
    w3_t, b3 = init_fc_params(k4, K3, N3, bias=True)
    p3 = prepare_fc_params(w3_t, b3)
    y3 = jax.block_until_ready(fc_layer(x3, p3, "tanh"))
    ref3 = jnp.tanh(x3 @ w3_t + b3)
    assert y3.shape == (B3, N3)
    assert rel_err(y3, ref3) < TOL, "unaligned mismatch"

    print("KERNEL_OK")
</pallas_src>

<mosaic_0001>
module attributes {stable_mosaic.version = 11 : i64} {
  func.func @_fc_kernel(%arg0: i32, %arg1: i32, %arg2: i32, %arg3: memref<8x128xbf16, #tpu.memory_space<vmem>>, %arg4: memref<128x128xbf16, #tpu.memory_space<vmem>>, %arg5: memref<1x128xf32, #tpu.memory_space<vmem>>, %arg6: memref<8x128xf32, #tpu.memory_space<vmem>>) attributes {dimension_semantics = [#tpu.dimension_semantics<parallel>, #tpu.dimension_semantics<parallel>, #tpu.dimension_semantics<arbitrary>], iteration_bounds = array<i64: 1, 1, 1>, scalar_prefetch = 0 : i64, scratch_operands = 0 : i64, tpu.core_type = #tpu.core_type<tc>, window_params = [{transform_indices = @transform_0, window_bounds = array<i64: 8, 128>}, {transform_indices = @transform_1, window_bounds = array<i64: 128, 128>}, {transform_indices = @transform_2, window_bounds = array<i64: 1, 128>}, {transform_indices = @transform_3, window_bounds = array<i64: 8, 128>}]} {
    %c0_i32 = arith.constant 0 : i32
    %0 = arith.cmpi eq, %arg2, %c0_i32 : i32
    %1 = arith.extui %0 : i1 to i32
    %c0_i32_0 = arith.constant 0 : i32
    %2 = arith.cmpi ne, %1, %c0_i32_0 : i32
    scf.if %2 {
      %c0_8 = arith.constant 0 : index
      %c0_9 = arith.constant 0 : index
      %9 = vector.load %arg5[%c0_8, %c0_9] : memref<1x128xf32, #tpu.memory_space<vmem>>, vector<1x128xf32>
      %10 = vector.shape_cast %9 : vector<1x128xf32> to vector<1x128xf32>
      %11 = vector.broadcast %10 : vector<1x128xf32> to vector<8x128xf32>
      %c0_10 = arith.constant 0 : index
      %c0_11 = arith.constant 0 : index
      %12 = vector.load %arg6[%c0_10, %c0_11] : memref<8x128xf32, #tpu.memory_space<vmem>>, vector<8x128xf32>
      tpu.vector_store %arg6[%c0_10, %c0_11], %11 {strides = array<i32>} : memref<8x128xf32, #tpu.memory_space<vmem>>, vector<8x128xf32>,
    } else {
    }
    %c0 = arith.constant 0 : index
    %c0_1 = arith.constant 0 : index
    %3 = vector.load %arg6[%c0, %c0_1] : memref<8x128xf32, #tpu.memory_space<vmem>>, vector<8x128xf32>
    %c0_2 = arith.constant 0 : index
    %c0_3 = arith.constant 0 : index
    %4 = vector.load %arg3[%c0_2, %c0_3] : memref<8x128xbf16, #tpu.memory_space<vmem>>, vector<8x128xbf16>
    %c0_4 = arith.constant 0 : index
    %c0_5 = arith.constant 0 : index
    %5 = vector.load %arg4[%c0_4, %c0_5] : memref<128x128xbf16, #tpu.memory_space<vmem>>, vector<128x128xbf16>
    %cst = arith.constant dense<0.000000e+00> : vector<8x128xf32>
    %6 = tpu.matmul %4, %5, %cst {dimension_numbers = #tpu.dot_dimension_numbers<[1], [0], [0], [1], [0, 0, 1, 1], [], []>} : vector<8x128xbf16>, vector<128x128xbf16>, vector<8x128xf32> -> vector<8x128xf32>
    %7 = arith.addf %3, %6 : vector<8x128xf32>
    %c0_6 = arith.constant 0 : index
    %c0_7 = arith.constant 0 : index
    %8 = vector.load %arg6[%c0_6, %c0_7] : memref<8x128xf32, #tpu.memory_space<vmem>>, vector<8x128xf32>
    tpu.vector_store %arg6[%c0_6, %c0_7], %7 {strides = array<i32>} : memref<8x128xf32, #tpu.memory_space<vmem>>, vector<8x128xf32>,
    return
  }
  func.func @transform_0(%arg0: i32, %arg1: i32, %arg2: i32) -> (i32, i32) {
    %c0_i32 = arith.constant 0 : i32
    return %arg0, %arg2 : i32, i32
  }
  func.func @transform_1(%arg0: i32, %arg1: i32, %arg2: i32) -> (i32, i32) {
    %c0_i32 = arith.constant 0 : i32
    return %arg2, %arg1 : i32, i32
  }
  func.func @transform_2(%arg0: i32, %arg1: i32, %arg2: i32) -> (i32, i32) {
    %c0_i32 = arith.constant 0 : i32
    %c0_i32_0 = arith.constant 0 : i32
    return %c0_i32, %arg1 : i32, i32
  }
  func.func @transform_3(%arg0: i32, %arg1: i32, %arg2: i32) -> (i32, i32) {
    %c0_i32 = arith.constant 0 : i32
    return %arg0, %arg1 : i32, i32
  }
}

</mosaic_0001>

<llo_original>
// kernel: tpu_custom_call.1
$region0: #{tpu_custom_call.1}
  #allocation0 [shape = 'u32[]', space=smem, size = 0x4, offset = 0x4, fixed_abs, tag = 'smem constant byte address 0x4 - core index']
  #allocation1 [shape = 'u32[144,128]{1,0:T(1,128)}', space=vmem, size = 0x12000, scoped, tag = 'internal scratch']
  %s0 = inlined_call_operand.hbm [shape: bf16[8,128], index: 0, kind: input, shape index: {}]
  %s1 = inlined_call_operand.hbm [shape: bf16[128,128], index: 1, kind: input, shape index: {}]
  %s2 = inlined_call_operand.vmem [shape: f32[1,128], index: 2, kind: input, shape index: {}]
  %s3 = inlined_call_operand.hbm [shape: f32[8,128], index: 3, kind: output, shape index: {}]
  %s4 = sld [smem:[#allocation0]]
  $region34: #{tpu_custom_call.1} parent=0
    _
  %s6 = ssub.s32 1, %s4
  %s7 = scalar_select 0, %s6, %s4
  $region1: #{tpu_custom_call.1} parent=0
    #allocation2 [shape = 'u8[2048]{0}', space=vmem, size = 0x800, scoped, tag = 'input window, operand 0, single buffered']
    #allocation3 [shape = 's32[1]{0}', space=sflag, size = 0x4, scoped, tag = 'scoped memory for tpu_custom_call.1']
    #allocation4 [shape = 's32[1]{0}', space=sflag, size = 0x4, scoped, tag = 'scoped memory for tpu_custom_call.1']
    #allocation5 [shape = 'u8[32768]{0}', space=vmem, size = 0x8000, scoped, tag = 'input window, operand 1, single buffered']
    #allocation6 [shape = 's32[1]{0}', space=sflag, size = 0x4, scoped, tag = 'scoped memory for tpu_custom_call.1']
    #allocation7 [shape = 'u8[4096]{0}', space=vmem, size = 0x1000, scoped, tag = 'output window, operand 0, single buffered']
    %8 = vsyncpa [#allocation3], 0
    %9 = vsyncpa [#allocation6], 0
    %10 = vsyncpa [#allocation4], 0
    // Predicated region
    $region2: #{tpu_custom_call.1} parent=1 // pred_check
      _
    $region3: #{tpu_custom_call.1} parent=1 // pred_check_branch
      %12 = sbr.rel (0) target = $region5
    $region4: #{tpu_custom_call.1} parent=1 // pred_region
      %s14 = ssub.s32 64, 64
      %15 = vsyncadd [#allocation3], %s14
      %s17 = sshll.u32 [#allocation2], 4
      %s18 = int_to_ptr.vmem [resolvable:$true] %s17
      %20 = dma.hbm_to_vmem [thread:$0]  %s0, 64, %s18, [#allocation3]
    $region5: #{tpu_custom_call.1} parent=1 // pred_fallthru
      _
    // Predicated region
    $region6: #{tpu_custom_call.1} parent=1 // pred_check
      _
    $region7: #{tpu_custom_call.1} parent=1 // pred_check_branch
      %22 = sbr.rel (0) target = $region9
    $region8: #{tpu_custom_call.1} parent=1 // pred_region
      %s24 = ssub.s32 1024, 1024
      %25 = vsyncadd [#allocation6], %s24
      %s26 = sshll.u32 [#allocation5], 4
      %s27 = int_to_ptr.vmem [resolvable:$true] %s26
      %32 = dma.hbm_to_vmem [thread:$0]  %s1, 1024, %s27, [#allocation6], 64, 64, 4
    $region9: #{tpu_custom_call.1} parent=1 // pred_fallthru
      _
    // Predicated region
    $region10: #{tpu_custom_call.1} parent=1 // pred_check
      _
    $region11: #{tpu_custom_call.1} parent=1 // pred_check_branch
      %34 = sbr.rel (0) target = $region13
    $region12: #{tpu_custom_call.1} parent=1 // pred_region
      _
    $region13: #{tpu_custom_call.1} parent=1 // pred_fallthru
      _
    // Predicated region
    $region14: #{tpu_custom_call.1} parent=1 // pred_check
      _
    $region15: #{tpu_custom_call.1} parent=1 // pred_check_branch
      %36 = sbr.rel (0) target = $region17
    $region16: #{tpu_custom_call.1} parent=1 // pred_region
      %37 = dma.done [#allocation3], 64
    $region17: #{tpu_custom_call.1} parent=1 // pred_fallthru
      _
    // Predicated region
    $region18: #{tpu_custom_call.1} parent=1 // pred_check
      _
    $region19: #{tpu_custom_call.1} parent=1 // pred_check_branch
      %39 = sbr.rel (0) target = $region21
    $region20: #{tpu_custom_call.1} parent=1 // pred_region
      %40 = dma.done [#allocation6], 1024
    $region21: #{tpu_custom_call.1} parent=1 // pred_fallthru
      _
    %p42 = scmp.eq.s32.totalorder 0, 0
    // Predicated region
    $region22: #{tpu_custom_call.1} parent=1 // pred_check
      %p43 = pneg %p42
    $region23: #{tpu_custom_call.1} parent=1 // pred_check_branch
      %45 = sbr.rel (%p43) target = $region25
    $region24: #{tpu_custom_call.1} parent=1 // pred_region
      %v46 = vld [vmem:[%s2] sm:$0x1]
      %v48 = vlaneseq
      %v49 = vshrl.u32 %v48, 7
      %v50 = vsub.s32 0, %v49
      %v51 = vrot.slane %v46, %v50
      %53 = vst [vmem:[#allocation7] sm:$0xff] %v51
    $region25: #{tpu_custom_call.1} parent=1 // pred_fallthru
      _
    %v54 = vld [vmem:[#allocation7] sm:$0xff]
    %v55 = vld [vmem:[#allocation2] sm:$0xf]
    %v56 = vld [vmem:[#allocation5] sm:$0xf]
    %v57 = vld [vmem:[#allocation5 + $0x4] sm:$0xf]
    %v58 = vld [vmem:[#allocation5 + $0x8] sm:$0xf]
    %v59 = vld [vmem:[#allocation5 + $0xc] sm:$0xf]
    %v60 = vld [vmem:[#allocation5 + $0x10] sm:$0xf]
    %v61 = vld [vmem:[#allocation5 + $0x14] sm:$0xf]
    %v62 = vld [vmem:[#allocation5 + $0x18] sm:$0xf]
    %v63 = vld [vmem:[#allocation5 + $0x1c] sm:$0xf]
    %v64 = vld [vmem:[#allocation5 + $0x20] sm:$0xf]
    %v65 = vld [vmem:[#allocation5 + $0x24] sm:$0xf]
    %v66 = vld [vmem:[#allocation5 + $0x28] sm:$0xf]
    %v67 = vld [vmem:[#allocation5 + $0x2c] sm:$0xf]
    %v68 = vld [vmem:[#allocation5 + $0x30] sm:$0xf]
    %v69 = vld [vmem:[#allocation5 + $0x34] sm:$0xf]
    %v70 = vld [vmem:[#allocation5 + $0x38] sm:$0xf]
    %v71 = vld [vmem:[#allocation5 + $0x3c] sm:$0xf]
    %v88 = vunpack.c.l.b16 %v56
    %v89 = vunpack.c.l.b16 %v57
    %v90 = vunpack.c.l.b16 %v58
    %v91 = vunpack.c.l.b16 %v59
    %v92 = vunpack.c.l.b16 %v60
    %v93 = vunpack.c.l.b16 %v61
    %v94 = vunpack.c.l.b16 %v62
    %v95 = vunpack.c.l.b16 %v63
    %v96 = vunpack.c.l.b16 %v64
    %v97 = vunpack.c.l.b16 %v65
    %v98 = vunpack.c.l.b16 %v66
    %v99 = vunpack.c.l.b16 %v67
    %v100 = vunpack.c.l.b16 %v68
    %v101 = vunpack.c.l.b16 %v69
    %v102 = vunpack.c.l.b16 %v70
    %v103 = vunpack.c.l.b16 %v71
    %v104 = vpack.c.b16 %v89, %v88
    %v105 = vpack.c.b16 %v91, %v90
    %v106 = vpack.c.b16 %v93, %v92
    %v107 = vpack.c.b16 %v95, %v94
    %v108 = vpack.c.b16 %v97, %v96
    %v109 = vpack.c.b16 %v99, %v98
    %v110 = vpack.c.b16 %v101, %v100
    %v111 = vpack.c.b16 %v103, %v102
    %120 = vmatprep.subr.bf16.mxu0 0
    %121 = vmatpush1.bf16.msra.mxu0 %v104
    %122 = vmatprep.subr.bf16.mxu0 0
    %123 = vmatpush1.bf16.msra.mxu0 %v105
    %124 = vmatprep.subr.bf16.mxu0 0
    %125 = vmatpush1.bf16.msra.mxu0 %v106
    %126 = vmatprep.subr.bf16.mxu0 0
    %127 = vmatpush1.bf16.msra.mxu0 %v107
    %128 = vmatprep.subr.bf16.mxu0 0
    %129 = vmatpush1.bf16.msra.mxu0 %v108
    %130 = vmatprep.subr.bf16.mxu0 0
    %131 = vmatpush1.bf16.msra.mxu0 %v109
    %132 = vmatprep.subr.bf16.mxu0 0
    %133 = vmatpush1.bf16.msra.mxu0 %v110
    %134 = vmatprep.subr.bf16.mxu0 0
    %135 = vmatpush1.bf16.msra.mxu0 %v111
    %136 = vmatprep.subr.bf16.mxu0 0
    %137 = vmatpush1.bf16.msra.mxu0 0
    %138 = vmatprep.subr.bf16.mxu0 0
    %139 = vmatpush1.bf16.msra.mxu0 0
    %140 = vmatprep.subr.bf16.mxu0 0
    %141 = vmatpush1.bf16.msra.mxu0 0
    %142 = vmatprep.subr.bf16.mxu0 0
    %143 = vmatpush1.bf16.msra.mxu0 0
    %144 = vmatprep.subr.bf16.mxu0 0
    %145 = vmatpush1.bf16.msra.mxu0 0
    %146 = vmatprep.subr.bf16.mxu0 0
    %147 = vmatpush1.bf16.msra.mxu0 0
    %148 = vmatprep.subr.bf16.mxu0 0
    %149 = vmatpush1.bf16.msra.mxu0 0
    %150 = vmatprep.subr.bf16.mxu0 0
    %151 = vmatpush1.bf16.msra.mxu0 0
    %152 = vmatprep.mubr.bf16.mxu0 0
    %153 = vmatmul.mubr.bf16.gmra.mrb[0].mxu0 %v55
    %v154 = vpop.f32.mrb[0].mxu0
    %v155 = vadd.f32 0.0, %v154
    %v156 = vpop.f32.mrb[0].mxu0
    %v157 = vpop.f32.mrb[0].mxu0
    %v158 = vpop.f32.mrb[0].mxu0
    %159 = vdwg.mxu0
    %v160 = vadd.f32 %v54, %v155
    %161 = vst [vmem:[#allocation7] sm:$0xff] %v160
    // Predicated region
    $region26: #{tpu_custom_call.1} parent=1 // pred_check
      _
    $region27: #{tpu_custom_call.1} parent=1 // pred_check_branch
      %163 = sbr.rel (0) target = $region29
    $region28: #{tpu_custom_call.1} parent=1 // pred_region
      %s165 = ssub.s32 128, 128
      %166 = vsyncadd [#allocation4], %s165
      %s168 = sshll.u32 [#allocation7], 4
      %s169 = int_to_ptr.vmem [resolvable:$true] %s168
      %171 = dma.vmem_to_hbm [thread:$0]  %s169, 128, %s3, [#allocation4]
    $region29: #{tpu_custom_call.1} parent=1 // pred_fallthru
      _
    // Predicated region
    $region30: #{tpu_custom_call.1} parent=1 // pred_check
      _
    $region31: #{tpu_custom_call.1} parent=1 // pred_check_branch
      %173 = sbr.rel (0) target = $region33
    $region32: #{tpu_custom_call.1} parent=1 // pred_region
      %174 = dma.done [#allocation4], 128
    $region33: #{tpu_custom_call.1} parent=1 // pred_fallthru
      _
    %175 = vsyncpa [#allocation3], 1
    %176 = vsyncpa [#allocation6], 1
    %177 = vsyncpa [#allocation4], 1

</llo_original>
